<compile_context>
chip_gen: v6e
topology: v6e:2x2x1
jax: 0.10.0
libtpu: 0.0.40
codegen_flags: <defaults>
</compile_context>

<pallas_src>
import functools

import jax
import jax.numpy as jnp
from jax.experimental import pallas as pl
from jax.experimental.pallas import tpu as pltpu

EPS = 1e-6  # torch F.pairwise_distance default eps (added to the difference)


def _contrastive_kernel(x1_ref, x2_ref, lbl_ref, out_ref, *, margin, tile_b):
    i = pl.program_id(0)

    # Hot path: everything stays in VMEM / vregs.
    x1 = x1_ref[...].astype(jnp.float32)
    x2 = x2_ref[...].astype(jnp.float32)
    diff = x1 - x2 + EPS
    dsq = jnp.sum(diff * diff, axis=-1, keepdims=True)      # (tile_b, 1)
    d = jnp.sqrt(dsq)                                        # EUP, margin term only

    # Labels are resident as one (B, 1) VMEM block; slice this tile's rows.
    row0 = pl.multiple_of(i * tile_b, tile_b)
    lbl = lbl_ref[pl.ds(row0, tile_b), :].astype(jnp.float32)   # (tile_b, 1)

    loss = (1.0 - lbl) * dsq + lbl * jnp.square(jnp.maximum(margin - d, 0.0))

    # One partial sum per grid step -> own output block (no shared accumulator,
    # so the grid axis can be "parallel").
    out_ref[...] = jnp.sum(loss, keepdims=True).reshape(1, 1, 1)


def _pick_tile_b(B, D, itemsize, feat_vmem_budget_bytes=16 * 1024 * 1024):
    """Largest batch tile s.t. 2 inputs x 2 pipeline buffers fit the budget."""
    max_rows = max(8, feat_vmem_budget_bytes // (4 * D * itemsize))
    if B <= max_rows:
        return B  # single tile; full-extent block is always legal
    sub = 16 if itemsize <= 2 else 8  # sublane packing granularity
    cand = (max_rows // sub) * sub
    while cand >= sub:
        if B % cand == 0:
            return cand
        cand -= sub
    return B  # fallback: no suitable divisor -> one big tile (still correct)


def contrastive_loss(output1, output2, label, *, margin=2.0, tile_b=None):
    B, D = output1.shape
    assert output2.shape == (B, D)
    assert label.shape == (B, 1)

    itemsize = jnp.dtype(output1.dtype).itemsize
    if tile_b is None:
        tile_b = _pick_tile_b(B, D, itemsize)
    assert B % tile_b == 0
    assert tile_b == B or tile_b % 8 == 0
    num_tiles = B // tile_b

    kernel = functools.partial(
        _contrastive_kernel, margin=float(margin), tile_b=tile_b
    )

    cost = pl.CostEstimate(
        flops=5 * B * D,
        transcendentals=B,
        bytes_accessed=2 * B * D * itemsize
        + B * jnp.dtype(label.dtype).itemsize
        + num_tiles * 4,
    )

    partial_sums = pl.pallas_call(
        kernel,
        out_shape=jax.ShapeDtypeStruct((num_tiles, 1, 1), jnp.float32),
        grid_spec=pltpu.PrefetchScalarGridSpec(
            num_scalar_prefetch=0,
            grid=(num_tiles,),
            in_specs=[
                pl.BlockSpec((tile_b, D), lambda i: (i, 0)),
                pl.BlockSpec((tile_b, D), lambda i: (i, 0)),
                # Whole label column resident in VMEM (constant block index ->
                # one DMA total); sliced per tile inside the kernel.
                pl.BlockSpec((B, 1), lambda i: (0, 0)),
            ],
            out_specs=pl.BlockSpec((1, 1, 1), lambda i: (i, 0, 0)),
        ),
        compiler_params=pltpu.CompilerParams(
            # Each step owns its output block -> safe to shard batch tiles
            # across TensorCores (megacore / v7x).
            dimension_semantics=("parallel",),
            vmem_limit_bytes=32 * 1024 * 1024,
        ),
        cost_estimate=cost,
    )(output1, output2, label)

    # Tiny final reduction + mean in JAX (num_tiles values).
    return jnp.sum(partial_sums) / jnp.float32(B)


def contrastive_loss_ref(output1, output2, label, margin=2.0):
    diff = output1.astype(jnp.float32) - output2.astype(jnp.float32) + EPS
    d = jnp.sqrt(jnp.sum(diff * diff, axis=-1, keepdims=True))
    lbl = label.astype(jnp.float32)
    loss = (1.0 - lbl) * d**2 + lbl * jnp.square(jnp.maximum(margin - d, 0.0))
    return jnp.mean(loss)


if __name__ == "__main__":
    key = jax.random.PRNGKey(0)
    k1, k2, k3, k4, k5, k6 = jax.random.split(key, 6)

    # Case 1: small shapes consistent with the module (single tile).
    B, D = 16, 32
    output1 = jax.random.normal(k1, (B, D), dtype=jnp.float32)
    output2 = jax.random.normal(k2, (B, D), dtype=jnp.float32)
    label = jax.random.bernoulli(k3, p=0.5, shape=(B, 1)).astype(jnp.float32)

    loss = jax.jit(lambda a, b, l: contrastive_loss(a, b, l))(output1, output2, label)
    jax.block_until_ready(loss)
    ref = contrastive_loss_ref(output1, output2, label)
    assert jnp.allclose(loss, ref, rtol=1e-5, atol=1e-5), (loss, ref)

    # Case 2: multi-tile grid (forced small tile) to exercise the resident-label
    # slicing and per-tile partial-sum path.
    B2, D2 = 64, 128
    o1b = jax.random.normal(k4, (B2, D2), dtype=jnp.float32)
    o2b = jax.random.normal(k5, (B2, D2), dtype=jnp.float32)
    lblb = jax.random.bernoulli(k6, p=0.5, shape=(B2, 1)).astype(jnp.float32)

    loss2 = jax.jit(lambda a, b, l: contrastive_loss(a, b, l, tile_b=8))(o1b, o2b, lblb)
    jax.block_until_ready(loss2)
    ref2 = contrastive_loss_ref(o1b, o2b, lblb)
    assert jnp.allclose(loss2, ref2, rtol=1e-5, atol=1e-5), (loss2, ref2)

    print("KERNEL_OK")
</pallas_src>

<mosaic_0001>
module attributes {stable_mosaic.version = 11 : i64} {
  func.func @_contrastive_kernel(%arg0: i32, %arg1: memref<16x32xf32, #tpu.memory_space<vmem>>, %arg2: memref<16x32xf32, #tpu.memory_space<vmem>>, %arg3: memref<16x1xf32, #tpu.memory_space<vmem>>, %arg4: memref<1x1x1xf32, #tpu.memory_space<vmem>>) attributes {dimension_semantics = [#tpu.dimension_semantics<parallel>], iteration_bounds = array<i64: 1>, scalar_prefetch = 0 : i64, scratch_operands = 0 : i64, tpu.core_type = #tpu.core_type<tc>, window_params = [{transform_indices = @transform_0, window_bounds = array<i64: 16, 32>}, {transform_indices = @transform_1, window_bounds = array<i64: 16, 32>}, {pipeline_mode = #tpu.pipeline_mode<synchronous>, transform_indices = @transform_2, window_bounds = array<i64: 16, 1>}, {transform_indices = @transform_3, window_bounds = array<i64: 1, 1, 1>}]} {
    %c0 = arith.constant 0 : index
    %c0_0 = arith.constant 0 : index
    %0 = vector.load %arg1[%c0, %c0_0] : memref<16x32xf32, #tpu.memory_space<vmem>>, vector<16x32xf32>
    %c0_1 = arith.constant 0 : index
    %c0_2 = arith.constant 0 : index
    %1 = vector.load %arg2[%c0_1, %c0_2] : memref<16x32xf32, #tpu.memory_space<vmem>>, vector<16x32xf32>
    %2 = arith.subf %0, %1 : vector<16x32xf32>
    %cst = arith.constant 9.99999997E-7 : f32
    %3 = vector.broadcast %cst : f32 to vector<16x32xf32>
    %4 = arith.addf %2, %3 : vector<16x32xf32>
    %5 = arith.mulf %4, %4 : vector<16x32xf32>
    %cst_3 = arith.constant dense<0.000000e+00> : vector<16xf32>
    %6 = vector.multi_reduction <add>, %5, %cst_3 [1] : vector<16x32xf32> to vector<16xf32>
    %7 = vector.shape_cast %6 : vector<16xf32> to vector<16x1xf32>
    %8 = math.sqrt %7 : vector<16x1xf32>
    %c16_i32 = arith.constant 16 : i32
    %9 = arith.muli %arg0, %c16_i32 : i32
    %10 = tpu.assume_multiple %9, 16 : i32
    %11 = arith.index_cast %10 : i32 to index
    %c0_4 = arith.constant 0 : index
    %12 = vector.load %arg3[%11, %c0_4] : memref<16x1xf32, #tpu.memory_space<vmem>>, vector<16x1xf32>
    %cst_5 = arith.constant 1.000000e+00 : f32
    %13 = vector.broadcast %cst_5 : f32 to vector<16x1xf32>
    %14 = arith.subf %13, %12 : vector<16x1xf32>
    %15 = arith.mulf %14, %7 : vector<16x1xf32>
    %cst_6 = arith.constant 2.000000e+00 : f32
    %16 = vector.broadcast %cst_6 : f32 to vector<16x1xf32>
    %17 = arith.subf %16, %8 : vector<16x1xf32>
    %cst_7 = arith.constant 0.000000e+00 : f32
    %18 = vector.broadcast %cst_7 : f32 to vector<16x1xf32>
    %19 = arith.maximumf %17, %18 : vector<16x1xf32>
    %20 = arith.mulf %19, %19 : vector<16x1xf32>
    %21 = arith.mulf %12, %20 : vector<16x1xf32>
    %22 = arith.addf %15, %21 : vector<16x1xf32>
    %23 = vector.shape_cast %22 : vector<16x1xf32> to vector<1x16x1xf32>
    %cst_8 = arith.constant dense<0.000000e+00> : vector<1xf32>
    %24 = vector.multi_reduction <add>, %23, %cst_8 [1, 2] : vector<1x16x1xf32> to vector<1xf32>
    %25 = vector.shape_cast %24 : vector<1xf32> to vector<1x1x1xf32>
    %26 = vector.extract %25[0, 0, 0] : f32 from vector<1x1x1xf32>
    %27 = vector.broadcast %26 : f32 to vector<1x1xf32>
    %28 = vector.shape_cast %27 : vector<1x1xf32> to vector<1x1x1xf32>
    %c0_9 = arith.constant 0 : index
    %c0_10 = arith.constant 0 : index
    %c0_11 = arith.constant 0 : index
    %29 = vector.load %arg4[%c0_9, %c0_10, %c0_11] : memref<1x1x1xf32, #tpu.memory_space<vmem>>, vector<1x1x1xf32>
    tpu.vector_store %arg4[%c0_9, %c0_10, %c0_11], %28 {strides = array<i32>} : memref<1x1x1xf32, #tpu.memory_space<vmem>>, vector<1x1x1xf32>,
    return
  }
  func.func @transform_0(%arg0: i32) -> (i32, i32) {
    %c0_i32 = arith.constant 0 : i32
    %c0_i32_0 = arith.constant 0 : i32
    return %arg0, %c0_i32 : i32, i32
  }
  func.func @transform_1(%arg0: i32) -> (i32, i32) {
    %c0_i32 = arith.constant 0 : i32
    %c0_i32_0 = arith.constant 0 : i32
    return %arg0, %c0_i32 : i32, i32
  }
  func.func @transform_2(%arg0: i32) -> (i32, i32) {
    %c0_i32 = arith.constant 0 : i32
    %c0_i32_0 = arith.constant 0 : i32
    %c0_i32_1 = arith.constant 0 : i32
    return %c0_i32, %c0_i32_0 : i32, i32
  }
  func.func @transform_3(%arg0: i32) -> (i32, i32, i32) {
    %c0_i32 = arith.constant 0 : i32
    %c0_i32_0 = arith.constant 0 : i32
    %c0_i32_1 = arith.constant 0 : i32
    return %arg0, %c0_i32, %c0_i32_0 : i32, i32, i32
  }
}

</mosaic_0001>

<llo_original>
// kernel: _lambda_.1
$region0: #{_lambda_.1}
  #allocation0 [shape = 'u32[]', space=smem, size = 0x4, offset = 0x4, fixed_abs, tag = 'smem constant byte address 0x4 - core index']
  #allocation1 [shape = 'u32[144,128]{1,0:T(1,128)}', space=vmem, size = 0x12000, scoped, tag = 'internal scratch']
  %s0 = inlined_call_operand.vmem [shape: f32[16,32], index: 0, kind: input, shape index: {}]
  %s1 = inlined_call_operand.hbm [shape: f32[16,32], index: 1, kind: input, shape index: {}]
  %s2 = inlined_call_operand.vmem [shape: f32[16,1], index: 2, kind: input, shape index: {}]
  %s3 = inlined_call_operand.hbm [shape: f32[1,1,1], index: 3, kind: output, shape index: {}]
  %s4 = sld [smem:[#allocation0]]
  $region26: #{_lambda_.1} parent=0
    _
  %s6 = ssub.s32 1, %s4
  %s7 = scalar_select 0, %s6, %s4
  $region1: #{_lambda_.1} parent=0
    #allocation2 [shape = 'u8[8192]{0}', space=vmem, size = 0x2000, scoped, tag = 'input window, operand 1, single buffered']
    #allocation3 [shape = 's32[1]{0}', space=sflag, size = 0x4, scoped, tag = 'scoped memory for _lambda_.1']
    #allocation4 [shape = 's32[1]{0}', space=sflag, size = 0x4, scoped, tag = 'scoped memory for _lambda_.1']
    #allocation5 [shape = 'u8[512]{0}', space=vmem, size = 0x400, scoped, tag = 'output window, operand 0, single buffered']
    %8 = vsyncpa [#allocation3], 0
    %9 = vsyncpa [#allocation4], 0
    // Predicated region
    $region2: #{_lambda_.1} parent=1 // pred_check
      _
    $region3: #{_lambda_.1} parent=1 // pred_check_branch
      %11 = sbr.rel (0) target = $region5
    $region4: #{_lambda_.1} parent=1 // pred_region
      _
    $region5: #{_lambda_.1} parent=1 // pred_fallthru
      _
    // Predicated region
    $region6: #{_lambda_.1} parent=1 // pred_check
      _
    $region7: #{_lambda_.1} parent=1 // pred_check_branch
      %13 = sbr.rel (0) target = $region9
    $region8: #{_lambda_.1} parent=1 // pred_region
      %s15 = ssub.s32 256, 256
      %16 = vsyncadd [#allocation3], %s15
      %s17 = sshll.u32 [#allocation2], 4
      %s18 = int_to_ptr.vmem [resolvable:$true] %s17
      %23 = dma.hbm_to_vmem [thread:$0]  %s1, 256, %s18, [#allocation3], 128, 128, 8
    $region9: #{_lambda_.1} parent=1 // pred_fallthru
      _
    // Predicated region
    $region10: #{_lambda_.1} parent=1 // pred_check
      _
    $region11: #{_lambda_.1} parent=1 // pred_check_branch
      %25 = sbr.rel (0) target = $region13
    $region12: #{_lambda_.1} parent=1 // pred_region
      _
    $region13: #{_lambda_.1} parent=1 // pred_fallthru
      _
    // Predicated region
    $region14: #{_lambda_.1} parent=1 // pred_check
      _
    $region15: #{_lambda_.1} parent=1 // pred_check_branch
      %27 = sbr.rel (0) target = $region17
    $region16: #{_lambda_.1} parent=1 // pred_region
      %28 = dma.done [#allocation3], 256
    $region17: #{_lambda_.1} parent=1 // pred_fallthru
      _
    %v29 = vld [vmem:[%s0] sm:$0xff]
    %v30 = vld [vmem:[%s0 + $0x8] sm:$0xff]
    %v31 = vld [vmem:[#allocation2] sm:$0xff]
    %v32 = vld [vmem:[#allocation2 + $0x8] sm:$0xff]
    %v33 = vsub.f32 %v29, %v31
    %v34 = vsub.f32 %v30, %v32
    %v35 = vadd.f32 %v33, 1e-06
    %v36 = vadd.f32 %v34, 1e-06
    %v37 = vmul.f32 %v35, %v35
    %v38 = vmul.f32 %v36, %v36
    %vm39 = vcmask 261120
    %v40 = vsel %vm39, %v37, 0.0
    %41 = vadd.xlane.f32.xlu0 %v40
    %v42 = vpop.xlane.xlu0 %41
    %v43 = vsel %vm39, %v38, 0.0
    %44 = vadd.xlane.f32.xlu0 %v43
    %v45 = vpop.xlane.xlu0 %44
    %v46 = vrsqrt.pop %v42
    %v47 = vmul.f32 %v42, %v46
    %vm48 = vcmp.eq.f32.partialorder %v42, inf
    %v49 = vsel %vm48, %v42, %v47
    %vm50 = vcmp.eq.f32.partialorder %v42, 0.0
    %v51 = vand.u32 %v42, 2147483648
    %v52 = vsel %vm50, %v51, %v49
    %v53 = vrsqrt.pop %v45
    %v54 = vmul.f32 %v45, %v53
    %vm55 = vcmp.eq.f32.partialorder %v45, inf
    %v56 = vsel %vm55, %v45, %v54
    %vm57 = vcmp.eq.f32.partialorder %v45, 0.0
    %v58 = vand.u32 %v45, 2147483648
    %v59 = vsel %vm57, %v58, %v56
    %s60 = smul.u32 0, 16
    %s61 = scalar_lea.vmem %s2, %s60
    %v62 = vld [vmem:[%s61] sm:$0xff]
    %v63 = vld [vmem:[%s61 + $0x8] sm:$0xff]
    %v64 = vsub.f32 1.0, %v62
    %v65 = vsub.f32 1.0, %v63
    %v66 = vmul.f32 %v64, %v42
    %v67 = vmul.f32 %v65, %v45
    %v68 = vsub.f32 2.0, %v52
    %v69 = vsub.f32 2.0, %v59
    %v70 = vmax.f32 %v68, 0.0
    %v71 = vmax.f32 %v69, 0.0
    %v72 = vmul.f32 %v70, %v70
    %v73 = vmul.f32 %v71, %v71
    %v74 = vmul.f32 %v62, %v72
    %v75 = vmul.f32 %v63, %v73
    %v76 = vadd.f32 %v66, %v74
    %v77 = vadd.f32 %v67, %v75
    %vm78 = vcmask 7168
    %v79 = vsel %vm78, %v76, 0.0
    %v80 = vsel %vm78, %v77, 0.0
    %v81 = vadd.f32 %v79, %v80
    %82 = vadd.xlane.f32.xlu0 %v81
    %v83 = vpop.xlane.xlu0 %82
    %v84 = vrot.slane %v83, 4
    %v85 = vadd.f32 %v83, %v84
    %v86 = vrot.slane %v85, 2
    %v87 = vadd.f32 %v85, %v86
    %v88 = vrot.slane %v87, 1
    %v89 = vadd.f32 %v87, %v88
    %s90 = vtos %v89
    %v91 = vstv %s90
    %vm92 = vcmask 0
    %93 = vst.msk [vmem:[#allocation5] sm:$0x1] %vm92, %v91
    // Predicated region
    $region18: #{_lambda_.1} parent=1 // pred_check
      _
    $region19: #{_lambda_.1} parent=1 // pred_check_branch
      %95 = sbr.rel (0) target = $region21
    $region20: #{_lambda_.1} parent=1 // pred_region
      %s97 = ssub.s32 16, 16
      %98 = vsyncadd [#allocation4], %s97
      %s100 = sshll.u32 [#allocation5], 4
      %s101 = int_to_ptr.vmem [resolvable:$true] %s100
      %103 = dma.vmem_to_hbm [thread:$0]  %s101, 16, %s3, [#allocation4]
    $region21: #{_lambda_.1} parent=1 // pred_fallthru
      _
    // Predicated region
    $region22: #{_lambda_.1} parent=1 // pred_check
      _
    $region23: #{_lambda_.1} parent=1 // pred_check_branch
      %105 = sbr.rel (0) target = $region25
    $region24: #{_lambda_.1} parent=1 // pred_region
      %106 = dma.done [#allocation4], 16
    $region25: #{_lambda_.1} parent=1 // pred_fallthru
      _
    %107 = vsyncpa [#allocation3], 1
    %108 = vsyncpa [#allocation4], 1

</llo_original>
